<compile_context>
chip_gen: v6e
topology: v6e:2x2x1
jax: 0.10.0
libtpu: 0.0.40
codegen_flags: <defaults>
</compile_context>

<pallas_src>
import functools

import jax
import jax.numpy as jnp
import numpy as np
from jax.experimental import pallas as pl
from jax.experimental.pallas import tpu as pltpu

_APPROX_GELU = True             # tanh GELU (EUP). False -> exact erf (nn.GELU default).
_COMPUTE_DTYPE = jnp.bfloat16   # MXU input dtype; accumulation stays float32.
_LANE = 128


def _gelu(x):
    if _APPROX_GELU:
        c = 0.7978845608028654  # sqrt(2/pi)
        return 0.5 * x * (1.0 + jnp.tanh(c * (x + 0.044715 * (x * x * x))))
    return 0.5 * x * (1.0 + jax.lax.erf(x * 0.7071067811865476))


def _round_up(n, m):
    return ((n + m - 1) // m) * m


def _dilated_tower_kernel(dil_ref, x_hbm, w1_ref, b1_ref, w2_ref, b2_ref, o_ref,
                          xbuf_ref, copy_sem, *, T, H, PAD, L_real):
    """One (batch, L-tile, layer) grid step.

    dil_ref : SMEM (NL,) int32      per-layer dilation (scalar prefetch)
    x_hbm   : HBM  (B, L+2H, Cp) f32  zero-padded activation (memory_space=ANY)
    w1_ref  : VMEM (1, 3, Cp, Mp) bf16  this layer's dilated-conv taps (BN1 folded)
    b1_ref  : VMEM (1, 1, Mp) f32
    w2_ref  : VMEM (1, Mp, Cp) bf16     this layer's 1x1 conv (BN2 folded)
    b2_ref  : VMEM (1, 1, Cp) f32
    o_ref   : VMEM (1, T, Cp) f32       output tile (written at the last layer)
    xbuf_ref: VMEM (LC + 2*PAD, Cp) f32 resident tile activation; PAD edge rows
              stay zero ('same' conv padding for the taps)
    """
    b = pl.program_id(0)
    t = pl.program_id(1)
    li = pl.program_id(2)
    NL = pl.num_programs(2)
    LB, Cp = xbuf_ref.shape
    LC = LB - 2 * PAD                                   # compute region = T + 2H
    cdt = _COMPUTE_DTYPE

    @pl.when(li == 0)
    def _load_tile():
        # Zero only the PAD halo rows (never written afterwards); re-done every
        # tile so per-core scratch under megacore is always initialized.
        z = jnp.zeros((PAD, Cp), xbuf_ref.dtype)
        xbuf_ref[pl.ds(0, PAD), :] = z
        xbuf_ref[pl.ds(PAD + LC, PAD), :] = z
        # DMA this tile's compute window (with sum(dilations) halo per side)
        # straight from the pre-padded HBM activation into the resident buffer.
        cp = pltpu.make_async_copy(
            x_hbm.at[b, pl.ds(t * T, LC), :],
            xbuf_ref.at[pl.ds(PAD, LC), :],
            copy_sem.at[0])
        cp.start()
        cp.wait()

    d = dil_ref[li]                                      # this layer's dilation
    x1 = xbuf_ref[pl.ds(PAD, LC), :]                     # center tap / residual (f32)
    x0 = xbuf_ref[pl.ds(PAD - d, LC), :]                 # left tap  x[l - d]
    x2 = xbuf_ref[pl.ds(PAD + d, LC), :]                 # right tap x[l + d]

    # Dilated k=3 conv as three lane-dense MXU matmuls, bf16 in / f32 acc.
    h = jnp.dot(x0.astype(cdt), w1_ref[0, 0], preferred_element_type=jnp.float32)
    h = h + jnp.dot(x1.astype(cdt), w1_ref[0, 1], preferred_element_type=jnp.float32)
    h = h + jnp.dot(x2.astype(cdt), w1_ref[0, 2], preferred_element_type=jnp.float32)
    h = _gelu(h + b1_ref[0])                             # (LC, Mp) f32

    # 1x1 conv (+ folded BN2); Dropout is identity in eval mode.
    out = jnp.dot(h.astype(cdt), w2_ref[0],
                  preferred_element_type=jnp.float32) + b2_ref[0]
    new_x = _gelu(x1 + out)                              # residual add + GELU, f32

    @pl.when(li < NL - 1)
    def _writeback():
        # Rows whose global position is outside [0, L) must be zero before the
        # next layer's taps (per-layer 'same' zero padding at the sequence ends).
        row = jax.lax.broadcasted_iota(jnp.int32, (LC, 1), 0)
        lo = H - t * T
        in_range = jnp.logical_and(row >= lo, row < lo + L_real)
        xbuf_ref[pl.ds(PAD, LC), :] = jnp.where(in_range, new_x, 0.0)

    @pl.when(li == NL - 1)
    def _emit():
        # Only the center T rows of the compute region are valid after NL layers.
        o_ref[0] = new_x[H:H + T, :].astype(o_ref.dtype)


def pack_params(params):
    """Pad/stack/cast the (BN-folded) per-layer weights once, outside the hot path."""
    C = params[0][0].shape[1]
    M = params[0][0].shape[2]
    Cp = _round_up(C, _LANE)
    Mp = _round_up(M, _LANE)
    w1_all = jnp.stack(
        [jnp.pad(w1, ((0, 0), (0, Cp - C), (0, Mp - M))) for (w1, _, _, _) in params]
    ).astype(_COMPUTE_DTYPE)                                           # (NL, 3, Cp, Mp)
    b1_all = jnp.stack(
        [jnp.pad(b1, ((0, 0), (0, Mp - M))) for (_, b1, _, _) in params]
    ).astype(jnp.float32)                                              # (NL, 1, Mp)
    w2_all = jnp.stack(
        [jnp.pad(w2, ((0, Mp - M), (0, Cp - C))) for (_, _, w2, _) in params]
    ).astype(_COMPUTE_DTYPE)                                           # (NL, Mp, Cp)
    b2_all = jnp.stack(
        [jnp.pad(b2, ((0, 0), (0, Cp - C))) for (_, _, _, b2) in params]
    ).astype(jnp.float32)                                              # (NL, 1, Cp)
    return w1_all, b1_all, w2_all, b2_all


@functools.partial(jax.jit, static_argnames=("dilations", "l_tile"))
def dilated_layers_forward_nlc(x_nlc, w1_all, b1_all, w2_all, b2_all,
                               *, dilations, l_tile=512):
    """Channels-last forward.  x_nlc: (B, L, C) float32 -> (B, L, C) float32."""
    B, L, C = x_nlc.shape
    NL = len(dilations)
    assert NL > 0, "DilatedLayers needs at least one dilated layer"
    assert w1_all.shape[0] == NL
    Cp = w1_all.shape[2]
    Mp = w1_all.shape[3]
    H = int(sum(dilations))            # overlap-discard halo per side
    dmax = int(max(dilations))
    PAD = _round_up(dmax, 8)           # sublane-aligned zero-halo for the taps

    T = min(int(l_tile), L)
    if L % T != 0 or T % 8 != 0:
        T = L                          # TODO(synk): support ragged L via partial tiles
    NT = L // T
    LC = T + 2 * H                     # per-tile compute region
    LB = LC + 2 * PAD                  # resident buffer rows

    # One-time pad: sequence halo (H per side) + channel lane-pad to Cp.
    x_pad = jnp.pad(x_nlc.astype(jnp.float32), ((0, 0), (H, H), (0, Cp - C)))
    dil_arr = jnp.asarray(dilations, dtype=jnp.int32)

    # VMEM budget computed from the actual shapes (+headroom), capped for v7x.
    est_bytes = (
        LB * Cp * 4                               # resident activation scratch (f32)
        + 2 * (3 * Cp * Mp + Mp * Cp) * 2         # double-buffered streamed bf16 weights
        + 2 * (Mp + Cp) * 4                       # double-buffered biases
        + 2 * T * Cp * 4                          # double-buffered output block
    )
    vmem_limit = max(est_bytes + (8 << 20), 32 << 20)
    vmem_limit = min(vmem_limit, 56 << 20)        # leave slack on v7x (64 MiB physical)
    vmem_limit = max(vmem_limit, est_bytes + (2 << 20))

    kern = functools.partial(_dilated_tower_kernel, T=T, H=H, PAD=PAD, L_real=L)

    y = pl.pallas_call(
        kern,
        out_shape=jax.ShapeDtypeStruct((B, L, Cp), jnp.float32),
        grid_spec=pltpu.PrefetchScalarGridSpec(
            num_scalar_prefetch=1,                       # dilations -> SMEM
            grid=(B, NT, NL),
            in_specs=[
                pl.BlockSpec(memory_space=pl.ANY),       # x_pad stays in HBM; manual DMA
                pl.BlockSpec((1, 3, Cp, Mp), lambda b, t, l, dil: (l, 0, 0, 0)),
                pl.BlockSpec((1, 1, Mp),     lambda b, t, l, dil: (l, 0, 0)),
                pl.BlockSpec((1, Mp, Cp),    lambda b, t, l, dil: (l, 0, 0)),
                pl.BlockSpec((1, 1, Cp),     lambda b, t, l, dil: (l, 0, 0)),
            ],
            out_specs=pl.BlockSpec((1, T, Cp), lambda b, t, l, dil: (b, t, 0)),
            scratch_shapes=[
                pltpu.VMEM((LB, Cp), jnp.float32),       # resident tile activation
                pltpu.SemaphoreType.DMA((1,)),
            ],
        ),
        compiler_params=pltpu.CompilerParams(
            dimension_semantics=("parallel", "parallel", "arbitrary"),
            vmem_limit_bytes=int(vmem_limit),
        ),
    )(dil_arr, x_pad, w1_all, b1_all, w2_all, b2_all)

    return y[:, :, :C]                 # drop channel lane-padding


def dilated_layers_forward(x_ncl, packed_params, *, dilations, l_tile=512):
    """PyTorch-layout compatibility wrapper: (B, C, L) -> (B, C, L).
    Prefer calling dilated_layers_forward_nlc directly with channels-last data
    to avoid the two full-activation transposes."""
    x = jnp.transpose(x_ncl, (0, 2, 1))
    y = dilated_layers_forward_nlc(x, *packed_params, dilations=dilations, l_tile=l_tile)
    return jnp.transpose(y, (0, 2, 1))


def make_dilations(num_layers, dilation_rate_init=1.0, rate_mult=1.5):
    rates, r = [], float(dilation_rate_init)
    for _ in range(num_layers):
        r *= rate_mult
        rates.append(int(np.round(r)))
    return tuple(rates)


def init_params(key, num_layers, c_in, c_mid, ksize=3, eps=1e-5):
    """Deterministic synthetic params; BatchNorm (eval) folded into convs."""
    params = []
    for i in range(num_layers):
        ks = jax.random.split(jax.random.fold_in(key, i), 12)
        # Conv1d(c_in -> c_mid, k=3) stored as (k, c_in, c_mid) for channels-last matmul.
        w1 = 0.2 * jax.random.normal(ks[0], (ksize, c_in, c_mid), jnp.float32)
        b1 = 0.1 * jax.random.normal(ks[1], (1, c_mid), jnp.float32)
        g1 = 1.0 + 0.1 * jax.random.normal(ks[2], (c_mid,), jnp.float32)
        be1 = 0.1 * jax.random.normal(ks[3], (c_mid,), jnp.float32)
        m1 = 0.1 * jax.random.normal(ks[4], (c_mid,), jnp.float32)
        v1 = 1.0 + 0.1 * jnp.abs(jax.random.normal(ks[5], (c_mid,), jnp.float32))
        s1 = g1 / jnp.sqrt(v1 + eps)
        w1f = w1 * s1
        b1f = b1 * s1 + (be1 - m1 * s1)

        # Conv1d(c_mid -> c_in, k=1) stored as (c_mid, c_in).
        w2 = 0.2 * jax.random.normal(ks[6], (c_mid, c_in), jnp.float32)
        b2 = 0.1 * jax.random.normal(ks[7], (1, c_in), jnp.float32)
        g2 = 1.0 + 0.1 * jax.random.normal(ks[8], (c_in,), jnp.float32)
        be2 = 0.1 * jax.random.normal(ks[9], (c_in,), jnp.float32)
        m2 = 0.1 * jax.random.normal(ks[10], (c_in,), jnp.float32)
        v2 = 1.0 + 0.1 * jnp.abs(jax.random.normal(ks[11], (c_in,), jnp.float32))
        s2 = g2 / jnp.sqrt(v2 + eps)
        w2f = w2 * s2
        b2f = b2 * s2 + (be2 - m2 * s2)

        params.append((w1f, b1f, w2f, b2f))
    return params


def _ref_forward(x_ncl, params, dilations):
    """Pure-JAX reference of the same eval-mode math (same compute-dtype casts)."""
    cdt = _COMPUTE_DTYPE
    x = jnp.transpose(x_ncl, (0, 2, 1)).astype(jnp.float32)
    for (w1, b1, w2, b2), d in zip(params, dilations):
        L = x.shape[1]
        xp = jnp.pad(x, ((0, 0), (d, d), (0, 0))).astype(cdt)
        w1c = w1.astype(cdt)
        h = (jnp.einsum("blc,cm->blm", xp[:, 0:L], w1c[0],
                        preferred_element_type=jnp.float32)
             + jnp.einsum("blc,cm->blm", xp[:, d:d + L], w1c[1],
                          preferred_element_type=jnp.float32)
             + jnp.einsum("blc,cm->blm", xp[:, 2 * d:2 * d + L], w1c[2],
                          preferred_element_type=jnp.float32))
        h = _gelu(h + b1)
        out = jnp.einsum("blm,mc->blc", h.astype(cdt), w2.astype(cdt),
                         preferred_element_type=jnp.float32) + b2
        x = _gelu(x + out)
    return jnp.transpose(x, (0, 2, 1))


if __name__ == "__main__":
    # Shapes consistent with DilatedLayers(num_dilated_conv=3, input_size=4,
    # channel_init=8) applied to an input of shape (B=2, C=4, L=16).
    num_dilated_conv = 3
    input_size = 4        # C_in
    channel_init = 8      # C_mid
    B, L = 2, 16

    key = jax.random.PRNGKey(0)
    kx, kp = jax.random.split(key)
    x = jax.random.normal(kx, (B, input_size, L), jnp.float32)   # PyTorch NCL

    dilations = make_dilations(num_dilated_conv)                 # (2, 2, 3)
    params = init_params(kp, num_dilated_conv, input_size, channel_init)
    packed = pack_params(params)                                 # hoisted, done once

    # l_tile=8 -> 2 L-tiles per batch element: exercises the overlap-discard
    # halo, the per-layer boundary masking, and the layer-streaming grid axis.
    y = dilated_layers_forward(x, packed, dilations=dilations, l_tile=8)
    y = jax.block_until_ready(y)

    y_ref = _ref_forward(x, params, dilations)
    assert y.shape == x.shape
    np.testing.assert_allclose(np.asarray(y), np.asarray(y_ref), rtol=2e-3, atol=2e-3)

    print("KERNEL_OK")
</pallas_src>

<mosaic_0001>
module attributes {stable_mosaic.version = 11 : i64} {
  func.func @_dilated_tower_kernel(%arg0: i32, %arg1: i32, %arg2: i32, %arg3: memref<3xi32, #tpu.memory_space<smem>>, %arg4: memref<2x30x128xf32, #tpu.memory_space<any>>, %arg5: memref<1x3x128x128xbf16, #tpu.memory_space<vmem>>, %arg6: memref<1x1x128xf32, #tpu.memory_space<vmem>>, %arg7: memref<1x128x128xbf16, #tpu.memory_space<vmem>>, %arg8: memref<1x1x128xf32, #tpu.memory_space<vmem>>, %arg9: memref<1x8x128xf32, #tpu.memory_space<vmem>>, %arg10: memref<38x128xf32, #tpu.memory_space<vmem>>, %arg11: memref<1x!tpu.dma_semaphore, #tpu.memory_space<semaphore_mem>>) attributes {dimension_semantics = [#tpu.dimension_semantics<parallel>, #tpu.dimension_semantics<parallel>, #tpu.dimension_semantics<arbitrary>], iteration_bounds = array<i64: 2, 2, 3>, scalar_prefetch = 1 : i64, scratch_operands = 2 : i64, tpu.core_type = #tpu.core_type<tc>, window_params = [{}, {transform_indices = @transform_1, window_bounds = array<i64: 1, 3, 128, 128>}, {transform_indices = @transform_2, window_bounds = array<i64: 1, 1, 128>}, {transform_indices = @transform_3, window_bounds = array<i64: 1, 128, 128>}, {transform_indices = @transform_4, window_bounds = array<i64: 1, 1, 128>}, {transform_indices = @transform_5, window_bounds = array<i64: 1, 8, 128>}]} {
    %c0_i32 = arith.constant 0 : i32
    %0 = arith.cmpi eq, %arg2, %c0_i32 : i32
    %1 = arith.extui %0 : i1 to i32
    %c0_i32_0 = arith.constant 0 : i32
    %2 = arith.cmpi ne, %1, %c0_i32_0 : i32
    scf.if %2 {
      %cst_37 = arith.constant 0.000000e+00 : f32
      %71 = vector.broadcast %cst_37 : f32 to vector<8x128xf32>
      %c0_38 = arith.constant 0 : index
      %c0_39 = arith.constant 0 : index
      %72 = vector.load %arg10[%c0_38, %c0_39] : memref<38x128xf32, #tpu.memory_space<vmem>>, vector<8x128xf32>
      tpu.vector_store %arg10[%c0_38, %c0_39], %71 {strides = array<i32>} : memref<38x128xf32, #tpu.memory_space<vmem>>, vector<8x128xf32>,
      %c30 = arith.constant 30 : index
      %c0_40 = arith.constant 0 : index
      %73 = vector.load %arg10[%c30, %c0_40] : memref<38x128xf32, #tpu.memory_space<vmem>>, vector<8x128xf32>
      tpu.vector_store %arg10[%c30, %c0_40], %71 {strides = array<i32>} : memref<38x128xf32, #tpu.memory_space<vmem>>, vector<8x128xf32>,
      %c8_i32_41 = arith.constant 8 : i32
      %74 = arith.muli %arg1, %c8_i32_41 : i32
      %c0_i32_42 = arith.constant 0 : i32
      %c0_i32_43 = arith.constant 0 : i32
      %75 = tpu.memref_slice %arg4[%arg0, %74, %c0_i32_43] : memref<2x30x128xf32, #tpu.memory_space<any>> -> memref<1x22x128xf32, #tpu.memory_space<any>>
      %76 = tpu.memref_squeeze %75 : memref<1x22x128xf32, #tpu.memory_space<any>> -> memref<22x128xf32, #tpu.memory_space<any>>
      %c8_i32_44 = arith.constant 8 : i32
      %c0_i32_45 = arith.constant 0 : i32
      %77 = tpu.memref_slice %arg10[%c8_i32_44, %c0_i32_45] : memref<38x128xf32, #tpu.memory_space<vmem>> -> memref<22x128xf32, #tpu.memory_space<vmem>>
      %78 = tpu.memref_slice %arg11[%c0_i32_42] : memref<1x!tpu.dma_semaphore, #tpu.memory_space<semaphore_mem>> -> memref<1x!tpu.dma_semaphore, #tpu.memory_space<semaphore_mem>>
      %79 = tpu.memref_squeeze %78 : memref<1x!tpu.dma_semaphore, #tpu.memory_space<semaphore_mem>> -> memref<!tpu.dma_semaphore, #tpu.memory_space<semaphore_mem>>
      tpu.enqueue_dma source(%76 : memref<22x128xf32, #tpu.memory_space<any>>) target(%77 : memref<22x128xf32, #tpu.memory_space<vmem>>) target_semaphore(%79 : memref<!tpu.dma_semaphore, #tpu.memory_space<semaphore_mem>>)
      %c0_i32_46 = arith.constant 0 : i32
      %c0_i32_47 = arith.constant 0 : i32
      %80 = tpu.memref_slice %arg4[%arg0, %74, %c0_i32_47] : memref<2x30x128xf32, #tpu.memory_space<any>> -> memref<1x22x128xf32, #tpu.memory_space<any>>
      %81 = tpu.memref_squeeze %80 : memref<1x22x128xf32, #tpu.memory_space<any>> -> memref<22x128xf32, #tpu.memory_space<any>>
      %c8_i32_48 = arith.constant 8 : i32
      %c0_i32_49 = arith.constant 0 : i32
      %82 = tpu.memref_slice %arg10[%c8_i32_48, %c0_i32_49] : memref<38x128xf32, #tpu.memory_space<vmem>> -> memref<22x128xf32, #tpu.memory_space<vmem>>
      %83 = tpu.memref_slice %arg11[%c0_i32_46] : memref<1x!tpu.dma_semaphore, #tpu.memory_space<semaphore_mem>> -> memref<1x!tpu.dma_semaphore, #tpu.memory_space<semaphore_mem>>
      %84 = tpu.memref_squeeze %83 : memref<1x!tpu.dma_semaphore, #tpu.memory_space<semaphore_mem>> -> memref<!tpu.dma_semaphore, #tpu.memory_space<semaphore_mem>>
      tpu.wait_dma2 semaphore(%84 : memref<!tpu.dma_semaphore, #tpu.memory_space<semaphore_mem>>) src(%81 : memref<22x128xf32, #tpu.memory_space<any>>) dst(%82 : memref<22x128xf32, #tpu.memory_space<vmem>>)
    } else {
    }
    %3 = arith.index_cast %arg2 : i32 to index
    %4 = memref.load %arg3[%3] : memref<3xi32, #tpu.memory_space<smem>>
    %c8 = arith.constant 8 : index
    %c0 = arith.constant 0 : index
    %5 = vector.load %arg10[%c8, %c0] : memref<38x128xf32, #tpu.memory_space<vmem>>, vector<22x128xf32>
    %c8_i32 = arith.constant 8 : i32
    %6 = arith.subi %c8_i32, %4 : i32
    %7 = arith.index_cast %6 : i32 to index
    %c0_1 = arith.constant 0 : index
    %8 = vector.load %arg10[%7, %c0_1] : memref<38x128xf32, #tpu.memory_space<vmem>>, vector<22x128xf32>
    %c8_i32_2 = arith.constant 8 : i32
    %9 = arith.addi %c8_i32_2, %4 : i32
    %10 = arith.index_cast %9 : i32 to index
    %c0_3 = arith.constant 0 : index
    %11 = vector.load %arg10[%10, %c0_3] : memref<38x128xf32, #tpu.memory_space<vmem>>, vector<22x128xf32>
    %12 = arith.truncf %8 : vector<22x128xf32> to vector<22x128xbf16>
    %c0_4 = arith.constant 0 : index
    %c0_5 = arith.constant 0 : index
    %c0_6 = arith.constant 0 : index
    %c0_7 = arith.constant 0 : index
    %13 = vector.load %arg5[%c0_4, %c0_5, %c0_6, %c0_7] : memref<1x3x128x128xbf16, #tpu.memory_space<vmem>>, vector<1x1x128x128xbf16>
    %14 = vector.shape_cast %13 : vector<1x1x128x128xbf16> to vector<128x128xbf16>
    %cst = arith.constant dense<0.000000e+00> : vector<22x128xf32>
    %15 = tpu.matmul %12, %14, %cst {dimension_numbers = #tpu.dot_dimension_numbers<[1], [0], [0], [1], [0, 0, 1, 1], [], []>} : vector<22x128xbf16>, vector<128x128xbf16>, vector<22x128xf32> -> vector<22x128xf32>
    %16 = arith.truncf %5 : vector<22x128xf32> to vector<22x128xbf16>
    %c0_8 = arith.constant 0 : index
    %c1 = arith.constant 1 : index
    %c0_9 = arith.constant 0 : index
    %c0_10 = arith.constant 0 : index
    %17 = vector.load %arg5[%c0_8, %c1, %c0_9, %c0_10] : memref<1x3x128x128xbf16, #tpu.memory_space<vmem>>, vector<1x1x128x128xbf16>
    %18 = vector.shape_cast %17 : vector<1x1x128x128xbf16> to vector<128x128xbf16>
    %cst_11 = arith.constant dense<0.000000e+00> : vector<22x128xf32>
    %19 = tpu.matmul %16, %18, %cst_11 {dimension_numbers = #tpu.dot_dimension_numbers<[1], [0], [0], [1], [0, 0, 1, 1], [], []>} : vector<22x128xbf16>, vector<128x128xbf16>, vector<22x128xf32> -> vector<22x128xf32>
    %20 = arith.addf %15, %19 : vector<22x128xf32>
    %21 = arith.truncf %11 : vector<22x128xf32> to vector<22x128xbf16>
    %c0_12 = arith.constant 0 : index
    %c2 = arith.constant 2 : index
    %c0_13 = arith.constant 0 : index
    %c0_14 = arith.constant 0 : index
    %22 = vector.load %arg5[%c0_12, %c2, %c0_13, %c0_14] : memref<1x3x128x128xbf16, #tpu.memory_space<vmem>>, vector<1x1x128x128xbf16>
    %23 = vector.shape_cast %22 : vector<1x1x128x128xbf16> to vector<128x128xbf16>
    %cst_15 = arith.constant dense<0.000000e+00> : vector<22x128xf32>
    %24 = tpu.matmul %21, %23, %cst_15 {dimension_numbers = #tpu.dot_dimension_numbers<[1], [0], [0], [1], [0, 0, 1, 1], [], []>} : vector<22x128xbf16>, vector<128x128xbf16>, vector<22x128xf32> -> vector<22x128xf32>
    %25 = arith.addf %20, %24 : vector<22x128xf32>
    %c0_16 = arith.constant 0 : index
    %c0_17 = arith.constant 0 : index
    %c0_18 = arith.constant 0 : index
    %26 = vector.load %arg6[%c0_16, %c0_17, %c0_18] : memref<1x1x128xf32, #tpu.memory_space<vmem>>, vector<1x1x128xf32>
    %27 = vector.shape_cast %26 : vector<1x1x128xf32> to vector<1x128xf32>
    %28 = vector.broadcast %27 : vector<1x128xf32> to vector<22x128xf32>
    %29 = arith.addf %25, %28 : vector<22x128xf32>
    %cst_19 = arith.constant 5.000000e-01 : f32
    %30 = vector.broadcast %cst_19 : f32 to vector<22x128xf32>
    %31 = arith.mulf %30, %29 : vector<22x128xf32>
    %32 = arith.mulf %29, %29 : vector<22x128xf32>
    %33 = arith.mulf %32, %29 : vector<22x128xf32>
    %cst_20 = arith.constant 4.471500e-02 : f32
    %34 = vector.broadcast %cst_20 : f32 to vector<22x128xf32>
    %35 = arith.mulf %34, %33 : vector<22x128xf32>
    %36 = arith.addf %29, %35 : vector<22x128xf32>
    %cst_21 = arith.constant 0.797884583 : f32
    %37 = vector.broadcast %cst_21 : f32 to vector<22x128xf32>
    %38 = arith.mulf %37, %36 : vector<22x128xf32>
    %39 = math.tanh %38 : vector<22x128xf32>
    %cst_22 = arith.constant 1.000000e+00 : f32
    %40 = vector.broadcast %cst_22 : f32 to vector<22x128xf32>
    %41 = arith.addf %40, %39 : vector<22x128xf32>
    %42 = arith.mulf %31, %41 : vector<22x128xf32>
    %43 = arith.truncf %42 : vector<22x128xf32> to vector<22x128xbf16>
    %c0_23 = arith.constant 0 : index
    %c0_24 = arith.constant 0 : index
    %c0_25 = arith.constant 0 : index
    %44 = vector.load %arg7[%c0_23, %c0_24, %c0_25] : memref<1x128x128xbf16, #tpu.memory_space<vmem>>, vector<1x128x128xbf16>
    %45 = vector.shape_cast %44 : vector<1x128x128xbf16> to vector<128x128xbf16>
    %cst_26 = arith.constant dense<0.000000e+00> : vector<22x128xf32>
    %46 = tpu.matmul %43, %45, %cst_26 {dimension_numbers = #tpu.dot_dimension_numbers<[1], [0], [0], [1], [0, 0, 1, 1], [], []>} : vector<22x128xbf16>, vector<128x128xbf16>, vector<22x128xf32> -> vector<22x128xf32>
    %c0_27 = arith.constant 0 : index
    %c0_28 = arith.constant 0 : index
    %c0_29 = arith.constant 0 : index
    %47 = vector.load %arg8[%c0_27, %c0_28, %c0_29] : memref<1x1x128xf32, #tpu.memory_space<vmem>>, vector<1x1x128xf32>
    %48 = vector.shape_cast %47 : vector<1x1x128xf32> to vector<1x128xf32>
    %49 = vector.broadcast %48 : vector<1x128xf32> to vector<22x128xf32>
    %50 = arith.addf %46, %49 : vector<22x128xf32>
    %51 = arith.addf %5, %50 : vector<22x128xf32>
    %cst_30 = arith.constant 5.000000e-01 : f32
    %52 = vector.broadcast %cst_30 : f32 to vector<22x128xf32>
    %53 = arith.mulf %52, %51 : vector<22x128xf32>
    %54 = arith.mulf %51, %51 : vector<22x128xf32>
    %55 = arith.mulf %54, %51 : vector<22x128xf32>
    %cst_31 = arith.constant 4.471500e-02 : f32
    %56 = vector.broadcast %cst_31 : f32 to vector<22x128xf32>
    %57 = arith.mulf %56, %55 : vector<22x128xf32>
    %58 = arith.addf %51, %57 : vector<22x128xf32>
    %cst_32 = arith.constant 0.797884583 : f32
    %59 = vector.broadcast %cst_32 : f32 to vector<22x128xf32>
    %60 = arith.mulf %59, %58 : vector<22x128xf32>
    %61 = math.tanh %60 : vector<22x128xf32>
    %cst_33 = arith.constant 1.000000e+00 : f32
    %62 = vector.broadcast %cst_33 : f32 to vector<22x128xf32>
    %63 = arith.addf %62, %61 : vector<22x128xf32>
    %64 = arith.mulf %53, %63 : vector<22x128xf32>
    %c2_i32 = arith.constant 2 : i32
    %65 = arith.cmpi slt, %arg2, %c2_i32 : i32
    %66 = arith.extui %65 : i1 to i32
    %c0_i32_34 = arith.constant 0 : i32
    %67 = arith.cmpi ne, %66, %c0_i32_34 : i32
    scf.if %67 {
      %71 = tpu.iota {dimensions = array<i32: 0>} : vector<22x1xi32>
      %c8_i32_37 = arith.constant 8 : i32
      %72 = arith.muli %arg1, %c8_i32_37 : i32
      %c7_i32 = arith.constant 7 : i32
      %73 = arith.subi %c7_i32, %72 : i32
      %74 = vector.broadcast %73 : i32 to vector<22x1xi32>
      %75 = arith.cmpi sge, %71, %74 : vector<22x1xi32>
      %c16_i32 = arith.constant 16 : i32
      %76 = arith.addi %73, %c16_i32 : i32
      %77 = vector.broadcast %76 : i32 to vector<22x1xi32>
      %78 = arith.cmpi slt, %71, %77 : vector<22x1xi32>
      %79 = arith.andi %75, %78 : vector<22x1xi1>
      %cst_38 = arith.constant 0.000000e+00 : f32
      %80 = vector.shape_cast %79 : vector<22x1xi1> to vector<22x1xi1>
      %81 = vector.broadcast %80 : vector<22x1xi1> to vector<22x128xi1>
      %82 = vector.broadcast %cst_38 : f32 to vector<22x128xf32>
      %83 = arith.select %81, %64, %82 : vector<22x128xi1>, vector<22x128xf32>
      %c8_39 = arith.constant 8 : index
      %c0_40 = arith.constant 0 : index
      %84 = vector.load %arg10[%c8_39, %c0_40] : memref<38x128xf32, #tpu.memory_space<vmem>>, vector<22x128xf32>
      tpu.vector_store %arg10[%c8_39, %c0_40], %83 {strides = array<i32>} : memref<38x128xf32, #tpu.memory_space<vmem>>, vector<22x128xf32>,
    } else {
    }
    %c2_i32_35 = arith.constant 2 : i32
    %68 = arith.cmpi eq, %arg2, %c2_i32_35 : i32
    %69 = arith.extui %68 : i1 to i32
    %c0_i32_36 = arith.constant 0 : i32
    %70 = arith.cmpi ne, %69, %c0_i32_36 : i32
    scf.if %70 {
      %71 = vector.extract_strided_slice %64 {offsets = [7, 0], sizes = [8, 128], strides = [1, 1]} : vector<22x128xf32> to vector<8x128xf32>
      %c0_37 = arith.constant 0 : index
      %c0_38 = arith.constant 0 : index
      %c0_39 = arith.constant 0 : index
      %72 = vector.load %arg9[%c0_37, %c0_38, %c0_39] : memref<1x8x128xf32, #tpu.memory_space<vmem>>, vector<1x8x128xf32>
      %73 = vector.shape_cast %72 : vector<1x8x128xf32> to vector<8x128xf32>
      %74 = vector.shape_cast %71 : vector<8x128xf32> to vector<1x8x128xf32>
      tpu.vector_store %arg9[%c0_37, %c0_38, %c0_39], %74 {strides = array<i32>} : memref<1x8x128xf32, #tpu.memory_space<vmem>>, vector<1x8x128xf32>,
    } else {
    }
    return
  }
  func.func @transform_1(%arg0: i32, %arg1: i32, %arg2: i32, %arg3: memref<3xi32, #tpu.memory_space<smem>>) -> (i32, i32, i32, i32) {
    %c0_i32 = arith.constant 0 : i32
    %c0_i32_0 = arith.constant 0 : i32
    %c0_i32_1 = arith.constant 0 : i32
    %c0_i32_2 = arith.constant 0 : i32
    return %arg2, %c0_i32, %c0_i32_0, %c0_i32_1 : i32, i32, i32, i32
  }
  func.func @transform_2(%arg0: i32, %arg1: i32, %arg2: i32, %arg3: memref<3xi32, #tpu.memory_space<smem>>) -> (i32, i32, i32) {
    %c0_i32 = arith.constant 0 : i32
    %c0_i32_0 = arith.constant 0 : i32
    %c0_i32_1 = arith.constant 0 : i32
    return %arg2, %c0_i32, %c0_i32_0 : i32, i32, i32
  }
  func.func @transform_3(%arg0: i32, %arg1: i32, %arg2: i32, %arg3: memref<3xi32, #tpu.memory_space<smem>>) -> (i32, i32, i32) {
    %c0_i32 = arith.constant 0 : i32
    %c0_i32_0 = arith.constant 0 : i32
    %c0_i32_1 = arith.constant 0 : i32
    return %arg2, %c0_i32, %c0_i32_0 : i32, i32, i32
  }
  func.func @transform_4(%arg0: i32, %arg1: i32, %arg2: i32, %arg3: memref<3xi32, #tpu.memory_space<smem>>) -> (i32, i32, i32) {
    %c0_i32 = arith.constant 0 : i32
    %c0_i32_0 = arith.constant 0 : i32
    %c0_i32_1 = arith.constant 0 : i32
    return %arg2, %c0_i32, %c0_i32_0 : i32, i32, i32
  }
  func.func @transform_5(%arg0: i32, %arg1: i32, %arg2: i32, %arg3: memref<3xi32, #tpu.memory_space<smem>>) -> (i32, i32, i32) {
    %c0_i32 = arith.constant 0 : i32
    %c0_i32_0 = arith.constant 0 : i32
    return %arg0, %arg1, %c0_i32 : i32, i32, i32
  }
}

</mosaic_0001>

<llo_original>
// kernel: dilated_layers_forward_nlc.1
$region0: #{dilated_layers_forward_nlc.1}
  #allocation0 [shape = 'u32[]', space=smem, size = 0x4, offset = 0x4, fixed_abs, tag = 'smem constant byte address 0x4 - core index']
  #allocation1 [shape = 'u32[144,128]{1,0:T(1,128)}', space=vmem, size = 0x12000, scoped, tag = 'internal scratch']
  #allocation2 [shape = 'f32[38,128]{1,0:T(8,128)}', space=vmem, size = 0x5000, scoped, tag = 'scratch operand']
  #allocation3 [shape = 's32[1]{0}', space=sflag, size = 0x4, scoped, tag = 'scratch operand']
  #allocation4 [shape = 's32[1]{0}', space=sflag, size = 0x4, scoped, tag = 'scoped memory for dilated_layers_forward_nlc.1']
  #allocation5 [shape = 'u8[512]{0}', space=smem, size = 0x200, scoped, tag = 'prefetched SMEM operand 0']
  #allocation10 [shape = 's32[]', space=sflag, size = 0x4, offset = 0, fixed_abs, tag = 'sflag constant byte address 0x0 - dummy sync flag']
  %s0 = inlined_call_operand.vmem [shape: s32[3], index: 0, kind: input, shape index: {}]
  %s1 = inlined_call_operand.vmem [shape: f32[2,30,128], index: 1, kind: input, shape index: {}]
  %s2 = inlined_call_operand.hbm [shape: bf16[3,3,128,128], index: 2, kind: input, shape index: {}]
  %s3 = inlined_call_operand.vmem [shape: f32[3,1,128], index: 3, kind: input, shape index: {}]
  %s4 = inlined_call_operand.hbm [shape: bf16[3,128,128], index: 4, kind: input, shape index: {}]
  %s5 = inlined_call_operand.vmem [shape: f32[3,1,128], index: 5, kind: input, shape index: {}]
  %s6 = inlined_call_operand.vmem [shape: f32[2,16,128], index: 6, kind: output, shape index: {}]
  %s7 = sld [smem:[#allocation0]]
  $region106: #{dilated_layers_forward_nlc.1} parent=0
    _
  %s9 = ssub.s32 1, %s7
  %s10 = scalar_select 0, %s9, %s7
  %s11 = sshll.u32 %s0, 4
  %s12 = int_to_ptr.vmem [resolvable:$true] %s11
  %14 = dma.vmem_to_smem %s12, 16, [#allocation5], [#allocation4]
  %15 = dma.done [#allocation4], 16
  %16 = sfence
  $region1: #{dilated_layers_forward_nlc.1} parent=0
    #allocation6 [shape = 'u8[196608]{0}', space=vmem, size = 0x30000, scoped, tag = 'input window, operand 2']
    #allocation7 [shape = 's32[2]{0}', space=sflag, size = 0x8, scoped, tag = 'scoped memory for dilated_layers_forward_nlc.1']
    #allocation8 [shape = 'u8[65536]{0}', space=vmem, size = 0x10000, scoped, tag = 'input window, operand 4']
    #allocation9 [shape = 's32[2]{0}', space=sflag, size = 0x8, scoped, tag = 'scoped memory for dilated_layers_forward_nlc.1']
    %17 = vsyncpa [#allocation7], 0
    %s18 = scalar_lea.sflag [#allocation7], 1
    %19 = vsyncpa %s18, 0
    %20 = vsyncpa [#allocation9], 0
    %s21 = scalar_lea.sflag [#allocation9], 1
    %22 = vsyncpa %s21, 0
    loop: start=0, step=1, limit=14
    $region2: #{dilated_layers_forward_nlc.1} parent=1 // loop_pre_header
      _
    $region3: #{dilated_layers_forward_nlc.1} parent=1 // loop_header
      %s24 = sphi 0, %s28
      %p25 = scmp.ge.s32.totalorder %s24, 14
      %s31 = sphi 0, %s50
      %s32 = sphi 0, %s46
      %s33 = sphi 0, %s42
      %s34 = sphi 0, %s31
      %s35 = sphi 0, %s32
      %s36 = sphi 0, %s33
      %s37 = sphi 0, %s34
      %s38 = sphi 0, %s35
      %s39 = sphi 0, %s36
      %s53 = sphi 0, %s55
      %s56 = sphi 0, %s53
      %s57 = sphi 0, %s56
      %s73 = sphi 0, %s57
      %s79 = sphi 0, %s81
      %s82 = sphi 0, %s79
      %s83 = sphi 0, %s82
      %s99 = sphi 0, %s83
      %s105 = sphi 0, %s107
      %s108 = sphi 0, %s105
      %s109 = sphi 0, %s108
      %s125 = sphi 0, %s109
      %s131 = sphi 0, %s133
      %s134 = sphi 0, %s131
      %s135 = sphi 0, %s134
      %s151 = sphi 0, %s135
      %s159 = sphi 0, %s161
      %s162 = sphi 0, %s159
      %s163 = sphi 0, %s162
      %s179 = sphi 0, %s163
    $region4: #{dilated_layers_forward_nlc.1} parent=1 // loop_header_branch
      %27 = sbr.rel (%p25) target = $region8
    $region5: #{dilated_layers_forward_nlc.1} parent=1 // loop_body
      %s29 = ssub.s32 %s24, 1
      %s30 = ssub.s32 %s24, 2
      %s40 = sadd.s32 1, %s33
      %p41 = scmp.ge.s32.totalorder %s40, 3
      %s42 = scalar_select %p41, 0, %s40
      %s43 = sadd.s32 1, %s32
      %s44 = scalar_select %p41, %s43, %s32
      %p45 = scmp.ge.s32.totalorder %s44, 2
      %s46 = scalar_select %p45, 0, %s44
      %s47 = sadd.s32 1, %s31
      %s48 = scalar_select %p45, %s47, %s31
      %p49 = scmp.ge.s32.totalorder %s48, 2
      %s50 = scalar_select %p49, 0, %s48
      %s51 = ssub.s32 %s33, %s42
      %p52 = scmp.eq.s32.totalorder %s51, 0
      %s54 = sadd.s32 %s53, 1
      %s55 = scalar_select %p52, %s53, %s54
      %p58 = pneg %p52
      %p59 = scmp.eq.s32.totalorder %s24, 11
      %p60 = por %p58, %p59
      %p61 = scmp.ne.s32.totalorder %s53, %s56
      %p62 = scmp.eq.s32.totalorder %s24, 0
      %p63 = por %p61, %p62
      %p64 = scmp.ne.s32.totalorder %s53, %s56
      %p65 = scmp.eq.s32.totalorder %s29, 11
      %p66 = por %p64, %p65
      %p67 = scmp.ne.s32.totalorder %s56, %s57
      %p68 = scmp.eq.s32.totalorder %s29, 0
      %p69 = por %p67, %p68
      %p70 = scmp.ne.s32.totalorder %s56, %s57
      %p71 = scmp.eq.s32.totalorder %s30, 11
      %p72 = por %p70, %p71
      %p74 = scmp.ne.s32.totalorder %s57, %s73
      %p75 = scmp.eq.s32.totalorder %s30, 0
      %p76 = por %p74, %p75
      %s77 = ssub.s32 %s33, %s42
      %p78 = scmp.eq.s32.totalorder %s77, 0
      %s80 = sadd.s32 %s79, 1
      %s81 = scalar_select %p78, %s79, %s80
      %p84 = pneg %p78
      %p85 = scmp.eq.s32.totalorder %s24, 11
      %p86 = por %p84, %p85
      %p87 = scmp.ne.s32.totalorder %s79, %s82
      %p88 = scmp.eq.s32.totalorder %s24, 0
      %p89 = por %p87, %p88
      %p90 = scmp.ne.s32.totalorder %s79, %s82
      %p91 = scmp.eq.s32.totalorder %s29, 11
      %p92 = por %p90, %p91
      %p93 = scmp.ne.s32.totalorder %s82, %s83
      %p94 = scmp.eq.s32.totalorder %s29, 0
      %p95 = por %p93, %p94
      %p96 = scmp.ne.s32.totalorder %s82, %s83
      %p97 = scmp.eq.s32.totalorder %s30, 11
      %p98 = por %p96, %p97
      %p100 = scmp.ne.s32.totalorder %s83, %s99
      %p101 = scmp.eq.s32.totalorder %s30, 0
      %p102 = por %p100, %p101
      %s103 = ssub.s32 %s33, %s42
      %p104 = scmp.eq.s32.totalorder %s103, 0
      %s106 = sadd.s32 %s105, 1
      %s107 = scalar_select %p104, %s105, %s106
      %p110 = pneg %p104
      %p111 = scmp.eq.s32.totalorder %s24, 11
      %p112 = por %p110, %p111
      %p113 = scmp.ne.s32.totalorder %s105, %s108
      %p114 = scmp.eq.s32.totalorder %s24, 0
      %p115 = por %p113, %p114
      %p116 = scmp.ne.s32.totalorder %s105, %s108
      %p117 = scmp.eq.s32.totalorder %s29, 11
      %p118 = por %p116, %p117
      %p119 = scmp.ne.s32.totalorder %s108, %s109
      %p120 = scmp.eq.s32.totalorder %s29, 0
      %p121 = por %p119, %p120
      %p122 = scmp.ne.s32.totalorder %s108, %s109
      %p123 = scmp.eq.s32.totalorder %s30, 11
      %p124 = por %p122, %p123
      %p126 = scmp.ne.s32.totalorder %s109, %s125
      %p127 = scmp.eq.s32.totalorder %s30, 0
      %p128 = por %p126, %p127
      %s129 = ssub.s32 %s33, %s42
      %p130 = scmp.eq.s32.totalorder %s129, 0
      %s132 = sadd.s32 %s131, 1
      %s133 = scalar_select %p130, %s131, %s132
      %p136 = pneg %p130
      %p137 = scmp.eq.s32.totalorder %s24, 11
      %p138 = por %p136, %p137
      %p139 = scmp.ne.s32.totalorder %s131, %s134
      %p140 = scmp.eq.s32.totalorder %s24, 0
      %p141 = por %p139, %p140
      %p142 = scmp.ne.s32.totalorder %s131, %s134
      %p143 = scmp.eq.s32.totalorder %s29, 11
      %p144 = por %p142, %p143
      %p145 = scmp.ne.s32.totalorder %s134, %s135
      %p146 = scmp.eq.s32.totalorder %s29, 0
      %p147 = por %p145, %p146
      %p148 = scmp.ne.s32.totalorder %s134, %s135
      %p149 = scmp.eq.s32.totalorder %s30, 11
      %p150 = por %p148, %p149
      %p152 = scmp.ne.s32.totalorder %s135, %s151
      %p153 = scmp.eq.s32.totalorder %s30, 0
      %p154 = por %p152, %p153
      %s155 = ssub.s32 %s31, %s50
      %s156 = ssub.s32 %s32, %s46
      %s157 = sor.u32 %s155, %s156
      %p158 = scmp.eq.s32.totalorder %s157, 0
      %s160 = sadd.s32 %s159, 1
      %s161 = scalar_select %p158, %s159, %s160
      %p164 = pneg %p158
      %p165 = scmp.eq.s32.totalorder %s24, 11
      %p166 = por %p164, %p165
      %p167 = scmp.ne.s32.totalorder %s159, %s162
      %p168 = scmp.eq.s32.totalorder %s24, 0
      %p169 = por %p167, %p168
      %p170 = scmp.ne.s32.totalorder %s159, %s162
      %p171 = scmp.eq.s32.totalorder %s29, 11
      %p172 = por %p170, %p171
      %p173 = scmp.ne.s32.totalorder %s162, %s163
      %p174 = scmp.eq.s32.totalorder %s29, 0
      %p175 = por %p173, %p174
      %p176 = scmp.ne.s32.totalorder %s162, %s163
      %p177 = scmp.eq.s32.totalorder %s30, 11
      %p178 = por %p176, %p177
      %p180 = scmp.ne.s32.totalorder %s163, %s179
      %p181 = scmp.eq.s32.totalorder %s30, 0
      %p182 = por %p180, %p181
      %p183 = scmp.le.s32.totalorder 1, %s24
      %p184 = scmp.lt.s32.totalorder %s24, 13
      %p185 = pnand %p183, %p184
      %p186 = pneg %p185
      // Predicated region
      $region9: #{dilated_layers_forward_nlc.1} parent=5 // pred_check
        _
      $region10: #{dilated_layers_forward_nlc.1} parent=5 // pred_check_branch
        %188 = sbr.rel (%p185) target = $region12
      $region11: #{dilated_layers_forward_nlc.1} parent=5 // pred_region
        %s189 = ssub.s32 %s24, 1
      $region12: #{dilated_layers_forward_nlc.1} parent=5 // pred_fallthru
        _
      %p190 = scmp.lt.s32.totalorder %s24, 12
      // Predicated region
      $region13: #{dilated_layers_forward_nlc.1} parent=5 // pred_check
        %p191 = pneg %p190
      $region14: #{dilated_layers_forward_nlc.1} parent=5 // pred_check_branch
        %193 = sbr.rel (%p191) target = $region16
      $region15: #{dilated_layers_forward_nlc.1} parent=5 // pred_region
        // Predicated region
        $region17: #{dilated_layers_forward_nlc.1} parent=15 // pred_check
          %p194 = pneg %p63
        $region18: #{dilated_layers_forward_nlc.1} parent=15 // pred_check_branch
          %196 = sbr.rel (%p194) target = $region20
        $region19: #{dilated_layers_forward_nlc.1} parent=15 // pred_region
          %s197 = sand.u32 %s53, 1
          %s198 = scalar_lea.sflag [#allocation7], %s197
          %s199 = sand.u32 %s53, 1
          %s200 = smul.addr %s199, 192
          %s201 = scalar_lea.vmem [#allocation6], %s200
          %s203 = ssub.s32 3072, 3072
          %204 = vsyncadd %s198, %s203
          %s205 = smul.addr %s33, 48
          %s206 = smul.addr %s205, 64
          %s207 = scalar_lea.hbm %s2, %s206
          %s208 = sshll.u32 %s201, 4
          %s209 = int_to_ptr.vmem [resolvable:$true] %s208
          %214 = dma.hbm_to_vmem [thread:$0]  %s207, 3072, %s209, %s198, 64, 64, 4
        $region20: #{dilated_layers_forward_nlc.1} parent=15 // pred_fallthru
          _
        // Predicated region
        $region21: #{dilated_layers_forward_nlc.1} parent=15 // pred_check
          %p215 = pneg %p89
        $region22: #{dilated_layers_forward_nlc.1} parent=15 // pred_check_branch
          %217 = sbr.rel (%p215) target = $region24
        $region23: #{dilated_layers_forward_nlc.1} parent=15 // pred_region
          %p218 = scmp.lt.s32.totalorder %s33, 2
          %s219 = scalar_select %p218, %s33, 2
          %s220 = scalar_lea.vmem %s3, %s219
        $region24: #{dilated_layers_forward_nlc.1} parent=15 // pred_fallthru
          _
        // Predicated region
        $region25: #{dilated_layers_forward_nlc.1} parent=15 // pred_check
          %p221 = pneg %p115
        $region26: #{dilated_layers_forward_nlc.1} parent=15 // pred_check_branch
          %223 = sbr.rel (%p221) target = $region28
        $region27: #{dilated_layers_forward_nlc.1} parent=15 // pred_region
          %s224 = sand.u32 %s105, 1
          %s225 = scalar_lea.sflag [#allocation9], %s224
          %s226 = sand.u32 %s105, 1
          %s227 = smul.addr %s226, 64
          %s228 = scalar_lea.vmem [#allocation8], %s227
          %s230 = ssub.s32 1024, 1024
          %231 = vsyncadd %s225, %s230
          %s232 = smul.addr %s33, 16
          %s233 = smul.addr %s232, 64
          %s234 = scalar_lea.hbm %s4, %s233
          %s235 = sshll.u32 %s228, 4
          %s236 = int_to_ptr.vmem [resolvable:$true] %s235
          %241 = dma.hbm_to_vmem [thread:$0]  %s234, 1024, %s236, %s225, 64, 64, 4
        $region28: #{dilated_layers_forward_nlc.1} parent=15 // pred_fallthru
          _
        // Predicated region
        $region29: #{dilated_layers_forward_nlc.1} parent=15 // pred_check
          %p242 = pneg %p141
        $region30: #{dilated_layers_forward_nlc.1} parent=15 // pred_check_branch
          %244 = sbr.rel (%p242) target = $region32
        $region31: #{dilated_layers_forward_nlc.1} parent=15 // pred_region
          %p245 = scmp.lt.s32.totalorder %s33, 2
          %s246 = scalar_select %p245, %s33, 2
          %s247 = scalar_lea.vmem %s5, %s246
        $region32: #{dilated_layers_forward_nlc.1} parent=15 // pred_fallthru
          _
      $region16: #{dilated_layers_forward_nlc.1} parent=5 // pred_fallthru
        _
      %p248 = scmp.le.s32.totalorder 1, %s24
      %p249 = scmp.lt.s32.totalorder %s24, 13
      %p250 = pnand %p248, %p249
      %p251 = pneg %p250
      // Predicated region
      $region33: #{dilated_layers_forward_nlc.1} parent=5 // pred_check
        _
      $region34: #{dilated_layers_forward_nlc.1} parent=5 // pred_check_branch
        %253 = sbr.rel (%p250) target = $region36
      $region35: #{dilated_layers_forward_nlc.1} parent=5 // pred_region
        %s254 = ssub.s32 %s24, 1
        %s255 = sand.u32 %s56, 1
        %s256 = scalar_lea.sflag [#allocation7], %s255
        %s257 = sand.u32 %s56, 1
        %s258 = smul.addr %s257, 192
        %s259 = scalar_lea.vmem [#allocation6], %s258
        // Predicated region
        $region37: #{dilated_layers_forward_nlc.1} parent=35 // pred_check
          %p260 = pneg %p69
        $region38: #{dilated_layers_forward_nlc.1} parent=35 // pred_check_branch
          %262 = sbr.rel (%p260) target = $region40
        $region39: #{dilated_layers_forward_nlc.1} parent=35 // pred_region
          %263 = dma.done %s256, 3072
        $region40: #{dilated_layers_forward_nlc.1} parent=35 // pred_fallthru
          _
        %s264 = sand.u32 %s108, 1
        %s265 = scalar_lea.sflag [#allocation9], %s264
        %s266 = sand.u32 %s108, 1
        %s267 = smul.addr %s266, 64
        %s268 = scalar_lea.vmem [#allocation8], %s267
        // Predicated region
        $region41: #{dilated_layers_forward_nlc.1} parent=35 // pred_check
          %p269 = pneg %p121
        $region42: #{dilated_layers_forward_nlc.1} parent=35 // pred_check_branch
          %271 = sbr.rel (%p269) target = $region44
        $region43: #{dilated_layers_forward_nlc.1} parent=35 // pred_region
          %272 = dma.done %s265, 1024
        $region44: #{dilated_layers_forward_nlc.1} parent=35 // pred_fallthru
          _
        %s273 = sand.u32 %s56, 1
        %s274 = scalar_lea.sflag [#allocation7], %s273
        %s275 = sand.u32 %s56, 1
        %s276 = smul.addr %s275, 192
        %s277 = scalar_lea.vmem [#allocation6], %s276
        %p278 = pneg %p69
        %p279 = pneg %p66
        %p280 = scmp.lt.s32.totalorder %s36, 2
        %s281 = scalar_select %p280, %s36, 2
        %s282 = scalar_lea.vmem %s3, %s281
        %p283 = pneg %p95
        %p284 = pneg %p92
        %s285 = sand.u32 %s108, 1
        %s286 = scalar_lea.sflag [#allocation9], %s285
        %s287 = sand.u32 %s108, 1
        %s288 = smul.addr %s287, 64
        %s289 = scalar_lea.vmem [#allocation8], %s288
        %p290 = pneg %p121
        %p291 = pneg %p118
        %p292 = scmp.lt.s32.totalorder %s36, 2
        %s293 = scalar_select %p292, %s36, 2
        %s294 = scalar_lea.vmem %s5, %s293
        %p295 = pneg %p147
        %p296 = pneg %p144
        %p297 = pneg %p175
        %p298 = pneg %p172
        %p299 = scmp.lt.s32.totalorder %s34, 1
        %s300 = scalar_select %p299, %s34, 1
        %p301 = scmp.lt.s32.totalorder %s35, 1
        %s302 = scalar_select %p301, %s35, 1
        %s303 = smul.addr %s300, 2
        %s304 = sadd.s32 %s302, %s303
        %s305 = smul.addr %s304, 8
        %s306 = scalar_lea.vmem %s6, %s305
        %p307 = scmp.lt.s32.totalorder %s36, 2
        %s308 = scalar_select %p307, %s36, 2
        %s309 = scalar_lea.vmem %s3, %s308
        %p310 = scmp.lt.s32.totalorder %s36, 2
        %s311 = scalar_select %p310, %s36, 2
        %s312 = scalar_lea.vmem %s5, %s311
        %p313 = scmp.lt.s32.totalorder %s34, 1
        %s314 = scalar_select %p313, %s34, 1
        %p315 = scmp.lt.s32.totalorder %s35, 1
        %s316 = scalar_select %p315, %s35, 1
        %s317 = smul.addr %s314, 2
        %s318 = sadd.s32 %s316, %s317
        %s319 = smul.addr %s318, 8
        %s320 = scalar_lea.vmem %s6, %s319
        %p322 = scmp.eq.s32.totalorder %s36, 0
        // Predicated region
        $region45: #{dilated_layers_forward_nlc.1} parent=35 // pred_check
          %p323 = pneg %p322
        $region46: #{dilated_layers_forward_nlc.1} parent=35 // pred_check_branch
          %325 = sbr.rel (%p323) target = $region48
        $region47: #{dilated_layers_forward_nlc.1} parent=35 // pred_region
          %326 = vst [vmem:[#allocation2] sm:$0xff] 0.0
          %327 = vst [vmem:[#allocation2 + $0x1e] sm:$0xff] 0.0
          %s328 = smul.u32 %s35, 8
          %s329 = smul.u32 %s34, 32
          %s330 = sadd.s32 %s328, %s329
          %s331 = scalar_lea.vmem %s1, %s330
          %s332 = scalar_lea.vmem [#allocation2], 8
          %p334 = scmp.lt.u32.totalorder 22, 8
          %p335 = pneg %p334
          // Predicated region
          $region49: #{dilated_layers_forward_nlc.1} parent=47 // pred_check
            _
          $region50: #{dilated_layers_forward_nlc.1} parent=47 // pred_check_branch
            %337 = sbr.rel (%p334) target = $region52
          $region51: #{dilated_layers_forward_nlc.1} parent=47 // pred_region
            %s353 = sand.u32 22, 7
            %p354 = scmp.eq.s32.totalorder %s353, 0
            %p355 = pneg %p354
            // Predicated region
            $region64: #{dilated_layers_forward_nlc.1} parent=51 // pred_check
              _
            $region65: #{dilated_layers_forward_nlc.1} parent=51 // pred_check_branch
              %357 = sbr.rel (%p354) target = $region67
            $region66: #{dilated_layers_forward_nlc.1} parent=51 // pred_region
              %s358 = sand.u32 22, 7
              %s359 = ssub.s32 22, %s358
              %s360 = scalar_lea.vmem %s331, %s359
              %s361 = ssub.s32 22, %s358
              %s362 = scalar_lea.vmem %s332, %s361 [#allocation2]
              loop: start=0, step=1, limit=1
              $region68: #{dilated_layers_forward_nlc.1} parent=66 // loop_pre_header
                _
              $region69: #{dilated_layers_forward_nlc.1} parent=66 // loop_header
                %s364 = sphi 0, %s368
                %p365 = scmp.ge.s32.totalorder %s364, 1
                %s369 = sphi %s331, %s331
                %s370 = sphi %s332, %s332
              $region70: #{dilated_layers_forward_nlc.1} parent=66 // loop_header_branch
                %367 = sbr.rel (%p365) target = $region74
              $region71: #{dilated_layers_forward_nlc.1} parent=66 // loop_body
                %v371 = vld [vmem:[%s369] sm:$0xff]
                %372 = vst [vmem:[%s370] sm:$0xff] %v371
                %v373 = vld [vmem:[%s369 + $0x8] sm:$0xff]
                %374 = vst [vmem:[%s370 + $0x8] sm:$0xff] %v373
              $region72: #{dilated_layers_forward_nlc.1} parent=66 // loop_footer
                %s368 = sadd.s32 1, %s364
              $region73: #{dilated_layers_forward_nlc.1} parent=66 // loop_footer_branch
                %363 = sbr.rel target = $region69
              $region74: #{dilated_layers_forward_nlc.1} parent=66 // loop_exit
                _
              %s375 = sshll.u32 1, %s358
              %s376 = ssub.s32 %s375, 1
              loop: start=0, step=1, limit=1
              $region75: #{dilated_layers_forward_nlc.1} parent=66 // loop_pre_header
                _
              $region76: #{dilated_layers_forward_nlc.1} parent=66 // loop_header
                %s378 = sphi 0, %s382
                %p379 = scmp.ge.s32.totalorder %s378, 1
                %s383 = sphi %s360, %s360
                %s384 = sphi %s362, %s362
              $region77: #{dilated_layers_forward_nlc.1} parent=66 // loop_header_branch
                %381 = sbr.rel (%p379) target = $region81
              $region78: #{dilated_layers_forward_nlc.1} parent=66 // loop_body
                %v385 = vld [vmem:[%s383] sm:%s376]
                %386 = vst [vmem:[%s384] sm:%s376] %v385
              $region79: #{dilated_layers_forward_nlc.1} parent=66 // loop_footer
                %s382 = sadd.s32 1, %s378
              $region80: #{dilated_layers_forward_nlc.1} parent=66 // loop_footer_branch
                %377 = sbr.rel target = $region76
              $region81: #{dilated_layers_forward_nlc.1} parent=66 // loop_exit
                _
            $region67: #{dilated_layers_forward_nlc.1} parent=51 // pred_fallthru
              _
          $region52: #{dilated_layers_forward_nlc.1} parent=47 // pred_fallthru
            _
          // Predicated region
          $region53: #{dilated_layers_forward_nlc.1} parent=47 // pred_check
            %p338 = pneg %p334
          $region54: #{dilated_layers_forward_nlc.1} parent=47 // pred_check_branch
            %340 = sbr.rel (%p338) target = $region56
          $region55: #{dilated_layers_forward_nlc.1} parent=47 // pred_region
            %s341 = sshll.u32 1, 22
            %s342 = ssub.s32 %s341, 1
            loop: start=0, step=1, limit=1
            $region57: #{dilated_layers_forward_nlc.1} parent=55 // loop_pre_header
              _
            $region58: #{dilated_layers_forward_nlc.1} parent=55 // loop_header
              %s344 = sphi 0, %s348
              %p345 = scmp.ge.s32.totalorder %s344, 1
              %s349 = sphi %s331, %s331
              %s350 = sphi %s332, %s332
            $region59: #{dilated_layers_forward_nlc.1} parent=55 // loop_header_branch
              %347 = sbr.rel (%p345) target = $region63
            $region60: #{dilated_layers_forward_nlc.1} parent=55 // loop_body
              %v351 = vld [vmem:[%s349] sm:%s342]
              %352 = vst [vmem:[%s350] sm:%s342] %v351
            $region61: #{dilated_layers_forward_nlc.1} parent=55 // loop_footer
              %s348 = sadd.s32 1, %s344
            $region62: #{dilated_layers_forward_nlc.1} parent=55 // loop_footer_branch
              %343 = sbr.rel target = $region58
            $region63: #{dilated_layers_forward_nlc.1} parent=55 // loop_exit
              _
          $region56: #{dilated_layers_forward_nlc.1} parent=47 // pred_fallthru
            _
          // Predicated region
          $region82: #{dilated_layers_forward_nlc.1} parent=47 // pred_check
            _
          $region83: #{dilated_layers_forward_nlc.1} parent=47 // pred_check_branch
            %389 = sbr.rel (0) target = $region85
          $region84: #{dilated_layers_forward_nlc.1} parent=47 // pred_region
            %390 = vsyncadd [#allocation3], 352
          $region85: #{dilated_layers_forward_nlc.1} parent=47 // pred_fallthru
            _
          %s391 = smul.u32 22, 1
          %s392 = sshll.u32 %s391, 4
          %393 = dma.done [#allocation3], %s392
        $region48: #{dilated_layers_forward_nlc.1} parent=35 // pred_fallthru
          _
        %s394 = sld [smem:[#allocation5 + %s36]]
        %v395 = vld [vmem:[#allocation2 + $0x8] sm:$0xff]
        %v396 = vld [vmem:[#allocation2 + $0x10] sm:$0xff]
        %v397 = vld [vmem:[#allocation2 + $0x18] sm:$0x3f]
        %s398 = ssub.s32 8, %s394
        %s399 = scalar_lea.vmem [#allocation2], %s398
        %v400 = vld [vmem:[%s399] sm:$0xff]
        %v401 = vld [vmem:[%s399 + $0x8] sm:$0xff]
        %v402 = vld [vmem:[%s399 + $0x10] sm:$0x3f]
        %s403 = sadd.s32 %s394, 8
        %s404 = scalar_lea.vmem [#allocation2], %s403
        %v405 = vld [vmem:[%s404] sm:$0xff]
        %v406 = vld [vmem:[%s404 + $0x8] sm:$0xff]
        %v407 = vld [vmem:[%s404 + $0x10] sm:$0x3f]
        %v408 = vpack.c.bf16 %v401, %v400
        %v409 = vpack.c.bf16 %v402, %v402
        %v410 = vld [vmem:[%s259] sm:$0xf]
        %v411 = vld [vmem:[%s259 + $0x4] sm:$0xf]
        %v412 = vld [vmem:[%s259 + $0x8] sm:$0xf]
        %v413 = vld [vmem:[%s259 + $0xc] sm:$0xf]
        %v414 = vld [vmem:[%s259 + $0x10] sm:$0xf]
        %v415 = vld [vmem:[%s259 + $0x14] sm:$0xf]
        %v416 = vld [vmem:[%s259 + $0x18] sm:$0xf]
        %v417 = vld [vmem:[%s259 + $0x1c] sm:$0xf]
        %v418 = vld [vmem:[%s259 + $0x20] sm:$0xf]
        %v419 = vld [vmem:[%s259 + $0x24] sm:$0xf]
        %v420 = vld [vmem:[%s259 + $0x28] sm:$0xf]
        %v421 = vld [vmem:[%s259 + $0x2c] sm:$0xf]
        %v422 = vld [vmem:[%s259 + $0x30] sm:$0xf]
        %v423 = vld [vmem:[%s259 + $0x34] sm:$0xf]
        %v424 = vld [vmem:[%s259 + $0x38] sm:$0xf]
        %v425 = vld [vmem:[%s259 + $0x3c] sm:$0xf]
        %v426 = vpack.c.bf16 %v396, %v395
        %v427 = vpack.c.bf16 %v397, %v397
        %s428 = scalar_lea.vmem %s259, 64 [#allocation6]
        %v429 = vld [vmem:[%s428] sm:$0xf]
        %v430 = vld [vmem:[%s428 + $0x4] sm:$0xf]
        %v431 = vld [vmem:[%s428 + $0x8] sm:$0xf]
        %v432 = vld [vmem:[%s428 + $0xc] sm:$0xf]
        %v433 = vld [vmem:[%s428 + $0x10] sm:$0xf]
        %v434 = vld [vmem:[%s428 + $0x14] sm:$0xf]
        %v435 = vld [vmem:[%s428 + $0x18] sm:$0xf]
        %v436 = vld [vmem:[%s428 + $0x1c] sm:$0xf]
        %v437 = vld [vmem:[%s428 + $0x20] sm:$0xf]
        %v438 = vld [vmem:[%s428 + $0x24] sm:$0xf]
        %v439 = vld [vmem:[%s428 + $0x28] sm:$0xf]
        %v440 = vld [vmem:[%s428 + $0x2c] sm:$0xf]
        %v441 = vld [vmem:[%s428 + $0x30] sm:$0xf]
        %v442 = vld [vmem:[%s428 + $0x34] sm:$0xf]
        %v443 = vld [vmem:[%s428 + $0x38] sm:$0xf]
        %v444 = vld [vmem:[%s428 + $0x3c] sm:$0xf]
        %v461 = vunpack.c.l.b16 %v429
        %v462 = vunpack.c.l.b16 %v430
        %v463 = vunpack.c.l.b16 %v431
        %v464 = vunpack.c.l.b16 %v432
        %v465 = vunpack.c.l.b16 %v433
        %v466 = vunpack.c.l.b16 %v434
        %v467 = vunpack.c.l.b16 %v435
        %v468 = vunpack.c.l.b16 %v436
        %v469 = vunpack.c.l.b16 %v437
        %v470 = vunpack.c.l.b16 %v438
        %v471 = vunpack.c.l.b16 %v439
        %v472 = vunpack.c.l.b16 %v440
        %v473 = vunpack.c.l.b16 %v441
        %v474 = vunpack.c.l.b16 %v442
        %v475 = vunpack.c.l.b16 %v443
        %v476 = vunpack.c.l.b16 %v444
        %v477 = vpack.c.b16 %v462, %v461
        %v478 = vpack.c.b16 %v464, %v463
        %v479 = vpack.c.b16 %v466, %v465
        %v480 = vpack.c.b16 %v468, %v467
        %v481 = vpack.c.b16 %v470, %v469
        %v482 = vpack.c.b16 %v472, %v471
        %v483 = vpack.c.b16 %v474, %v473
        %v484 = vpack.c.b16 %v476, %v475
        %493 = vmatprep.subr.bf16.mxu0 0
        %494 = vmatpush1.bf16.msra.mxu0 %v484
        %495 = vmatprep.subr.bf16.mxu0 0
        %496 = vmatpush1.bf16.msra.mxu0 %v483
        %497 = vmatprep.subr.bf16.mxu0 0
        %498 = vmatpush1.bf16.msra.mxu0 %v482
        %499 = vmatprep.subr.bf16.mxu0 0
        %500 = vmatpush1.bf16.msra.mxu0 %v481
        %501 = vmatprep.subr.bf16.mxu0 0
        %502 = vmatpush1.bf16.msra.mxu0 %v480
        %503 = vmatprep.subr.bf16.mxu0 0
        %504 = vmatpush1.bf16.msra.mxu0 %v479
        %505 = vmatprep.subr.bf16.mxu0 0
        %506 = vmatpush1.bf16.msra.mxu0 %v478
        %507 = vmatprep.subr.bf16.mxu0 0
        %508 = vmatpush1.bf16.msra.mxu0 %v477
        %509 = vmatprep.subr.bf16.mxu0 0
        %510 = vmatpush2.bf16.msra.mxu0 0
        %511 = vmatprep.subr.bf16.mxu0 0
        %512 = vmatpush2.bf16.msra.mxu0 0
        %513 = vmatprep.subr.bf16.mxu0 0
        %514 = vmatpush2.bf16.msra.mxu0 0
        %515 = vmatprep.subr.bf16.mxu0 0
        %516 = vmatpush2.bf16.msra.mxu0 0
        %517 = vmatprep.subr.bf16.mxu0 0
        %518 = vmatpush2.bf16.msra.mxu0 0
        %519 = vmatprep.subr.bf16.mxu0 0
        %520 = vmatpush2.bf16.msra.mxu0 0
        %521 = vmatprep.subr.bf16.mxu0 0
        %522 = vmatpush2.bf16.msra.mxu0 0
        %523 = vmatprep.subr.bf16.mxu0 0
        %524 = vmatpush2.bf16.msra.mxu0 0
        %525 = vmatprep.mubr.bf16.mxu0 0
        %526 = vmatmul.mubr.bf16.gmra.mxu0 %v426
        %v527 = vpop.f32.mrf.mxu0
        %v528 = vadd.f32 0.0, %v527
        %v529 = vpop.f32.mrf.mxu0
        %v530 = vpop.f32.mrf.mxu0
        %v531 = vadd.f32 0.0, %v530
        %v532 = vpop.f32.mrf.mxu0
        %533 = vmatprep.mubr.bf16.mxu0 0
        %534 = vmatmul.mubr.bf16.gmra.mxu0 %v427
        %v535 = vpop.f32.mrf.mxu0
        %v536 = vadd.f32 0.0, %v535
        %v537 = vpop.f32.mrf.mxu0
        %v538 = vpop.f32.mrf.mxu0
        %v539 = vpop.f32.mrf.mxu0
        %540 = vdwg.mxu0
        %v557 = vunpack.c.l.b16 %v410
        %v558 = vunpack.c.l.b16 %v411
        %v559 = vunpack.c.l.b16 %v412
        %v560 = vunpack.c.l.b16 %v413
        %v561 = vunpack.c.l.b16 %v414
        %v562 = vunpack.c.l.b16 %v415
        %v563 = vunpack.c.l.b16 %v416
        %v564 = vunpack.c.l.b16 %v417
        %v565 = vunpack.c.l.b16 %v418
        %v566 = vunpack.c.l.b16 %v419
        %v567 = vunpack.c.l.b16 %v420
        %v568 = vunpack.c.l.b16 %v421
        %v569 = vunpack.c.l.b16 %v422
        %v570 = vunpack.c.l.b16 %v423
        %v571 = vunpack.c.l.b16 %v424
        %v572 = vunpack.c.l.b16 %v425
        %v573 = vpack.c.b16 %v558, %v557
        %v574 = vpack.c.b16 %v560, %v559
        %v575 = vpack.c.b16 %v562, %v561
        %v576 = vpack.c.b16 %v564, %v563
        %v577 = vpack.c.b16 %v566, %v565
        %v578 = vpack.c.b16 %v568, %v567
        %v579 = vpack.c.b16 %v570, %v569
        %v580 = vpack.c.b16 %v572, %v571
        %589 = vmatprep.subr.bf16.mxu0 0
        %590 = vmatpush1.bf16.msra.mxu0 %v580
        %591 = vmatprep.subr.bf16.mxu0 0
        %592 = vmatpush1.bf16.msra.mxu0 %v579
        %593 = vmatprep.subr.bf16.mxu0 0
        %594 = vmatpush1.bf16.msra.mxu0 %v578
        %595 = vmatprep.subr.bf16.mxu0 0
        %596 = vmatpush1.bf16.msra.mxu0 %v577
        %597 = vmatprep.subr.bf16.mxu0 0
        %598 = vmatpush1.bf16.msra.mxu0 %v576
        %599 = vmatprep.subr.bf16.mxu0 0
        %600 = vmatpush1.bf16.msra.mxu0 %v575
        %601 = vmatprep.subr.bf16.mxu0 0
        %602 = vmatpush1.bf16.msra.mxu0 %v574
        %603 = vmatprep.subr.bf16.mxu0 0
        %604 = vmatpush1.bf16.msra.mxu0 %v573
        %605 = vmatprep.subr.bf16.mxu0 0
        %606 = vmatpush2.bf16.msra.mxu0 0
        %607 = vmatprep.subr.bf16.mxu0 0
        %608 = vmatpush2.bf16.msra.mxu0 0
        %609 = vmatprep.subr.bf16.mxu0 0
        %610 = vmatpush2.bf16.msra.mxu0 0
        %611 = vmatprep.subr.bf16.mxu0 0
        %612 = vmatpush2.bf16.msra.mxu0 0
        %613 = vmatprep.subr.bf16.mxu0 0
        %614 = vmatpush2.bf16.msra.mxu0 0
        %615 = vmatprep.subr.bf16.mxu0 0
        %616 = vmatpush2.bf16.msra.mxu0 0
        %617 = vmatprep.subr.bf16.mxu0 0
        %618 = vmatpush2.bf16.msra.mxu0 0
        %619 = vmatprep.subr.bf16.mxu0 0
        %620 = vmatpush2.bf16.msra.mxu0 0
        %621 = vmatprep.mubr.bf16.mxu0 0
        %622 = vmatmul.mubr.bf16.gmra.mxu0 %v408
        %v623 = vpop.f32.mrf.mxu0
        %v624 = vadd.f32 %v528, %v623
        %v625 = vpop.f32.mrf.mxu0
        %v626 = vpop.f32.mrf.mxu0
        %v627 = vadd.f32 %v531, %v626
        %v628 = vpop.f32.mrf.mxu0
        %629 = vmatprep.mubr.bf16.mxu0 0
        %630 = vmatmul.mubr.bf16.gmra.mxu0 %v409
        %v631 = vpop.f32.mrf.mxu0
        %v632 = vadd.f32 %v536, %v631
        %v633 = vpop.f32.mrf.mxu0
        %v634 = vpop.f32.mrf.mxu0
        %v635 = vpop.f32.mrf.mxu0
        %636 = vdwg.mxu0
        %v637 = vpack.c.bf16 %v406, %v405
        %v638 = vpack.c.bf16 %v407, %v407
        %s639 = scalar_lea.vmem %s259, 128 [#allocation6]
        %v640 = vld [vmem:[%s639] sm:$0xf]
        %v641 = vld [vmem:[%s639 + $0x4] sm:$0xf]
        %v642 = vld [vmem:[%s639 + $0x8] sm:$0xf]
        %v643 = vld [vmem:[%s639 + $0xc] sm:$0xf]
        %v644 = vld [vmem:[%s639 + $0x10] sm:$0xf]
        %v645 = vld [vmem:[%s639 + $0x14] sm:$0xf]
        %v646 = vld [vmem:[%s639 + $0x18] sm:$0xf]
        %v647 = vld [vmem:[%s639 + $0x1c] sm:$0xf]
        %v648 = vld [vmem:[%s639 + $0x20] sm:$0xf]
        %v649 = vld [vmem:[%s639 + $0x24] sm:$0xf]
        %v650 = vld [vmem:[%s639 + $0x28] sm:$0xf]
        %v651 = vld [vmem:[%s639 + $0x2c] sm:$0xf]
        %v652 = vld [vmem:[%s639 + $0x30] sm:$0xf]
        %v653 = vld [vmem:[%s639 + $0x34] sm:$0xf]
        %v654 = vld [vmem:[%s639 + $0x38] sm:$0xf]
        %v655 = vld [vmem:[%s639 + $0x3c] sm:$0xf]
        %v672 = vunpack.c.l.b16 %v640
        %v673 = vunpack.c.l.b16 %v641
        %v674 = vunpack.c.l.b16 %v642
        %v675 = vunpack.c.l.b16 %v643
        %v676 = vunpack.c.l.b16 %v644
        %v677 = vunpack.c.l.b16 %v645
        %v678 = vunpack.c.l.b16 %v646
        %v679 = vunpack.c.l.b16 %v647
        %v680 = vunpack.c.l.b16 %v648
        %v681 = vunpack.c.l.b16 %v649
        %v682 = vunpack.c.l.b16 %v650
        %v683 = vunpack.c.l.b16 %v651
        %v684 = vunpack.c.l.b16 %v652
        %v685 = vunpack.c.l.b16 %v653
        %v686 = vunpack.c.l.b16 %v654
        %v687 = vunpack.c.l.b16 %v655
        %v688 = vpack.c.b16 %v673, %v672
        %v689 = vpack.c.b16 %v675, %v674
        %v690 = vpack.c.b16 %v677, %v676
        %v691 = vpack.c.b16 %v679, %v678
        %v692 = vpack.c.b16 %v681, %v680
        %v693 = vpack.c.b16 %v683, %v682
        %v694 = vpack.c.b16 %v685, %v684
        %v695 = vpack.c.b16 %v687, %v686
        %704 = vmatprep.subr.bf16.mxu0 0
        %705 = vmatpush1.bf16.msra.mxu0 %v695
        %706 = vmatprep.subr.bf16.mxu0 0
        %707 = vmatpush1.bf16.msra.mxu0 %v694
        %708 = vmatprep.subr.bf16.mxu0 0
        %709 = vmatpush1.bf16.msra.mxu0 %v693
        %710 = vmatprep.subr.bf16.mxu0 0
        %711 = vmatpush1.bf16.msra.mxu0 %v692
        %712 = vmatprep.subr.bf16.mxu0 0
        %713 = vmatpush1.bf16.msra.mxu0 %v691
        %714 = vmatprep.subr.bf16.mxu0 0
        %715 = vmatpush1.bf16.msra.mxu0 %v690
        %716 = vmatprep.subr.bf16.mxu0 0
        %717 = vmatpush1.bf16.msra.mxu0 %v689
        %718 = vmatprep.subr.bf16.mxu0 0
        %719 = vmatpush1.bf16.msra.mxu0 %v688
        %720 = vmatprep.subr.bf16.mxu0 0
        %721 = vmatpush2.bf16.msra.mxu0 0
        %722 = vmatprep.subr.bf16.mxu0 0
        %723 = vmatpush2.bf16.msra.mxu0 0
        %724 = vmatprep.subr.bf16.mxu0 0
        %725 = vmatpush2.bf16.msra.mxu0 0
        %726 = vmatprep.subr.bf16.mxu0 0
        %727 = vmatpush2.bf16.msra.mxu0 0
        %728 = vmatprep.subr.bf16.mxu0 0
        %729 = vmatpush2.bf16.msra.mxu0 0
        %730 = vmatprep.subr.bf16.mxu0 0
        %731 = vmatpush2.bf16.msra.mxu0 0
        %732 = vmatprep.subr.bf16.mxu0 0
        %733 = vmatpush2.bf16.msra.mxu0 0
        %734 = vmatprep.subr.bf16.mxu0 0
        %735 = vmatpush2.bf16.msra.mxu0 0
        %736 = vmatprep.mubr.bf16.mxu0 0
        %737 = vmatmul.mubr.bf16.gmra.mxu0 %v637
        %v738 = vpop.f32.mrf.mxu0
        %v739 = vadd.f32 0.0, %v738
        %v740 = vpop.f32.mrf.mxu0
        %v741 = vpop.f32.mrf.mxu0
        %v742 = vadd.f32 0.0, %v741
        %v743 = vpop.f32.mrf.mxu0
        %744 = vmatprep.mubr.bf16.mxu0 0
        %745 = vmatmul.mubr.bf16.gmra.mxu0 %v638
        %v746 = vpop.f32.mrf.mxu0
        %v747 = vadd.f32 0.0, %v746
        %v748 = vpop.f32.mrf.mxu0
        %v749 = vpop.f32.mrf.mxu0
        %v750 = vpop.f32.mrf.mxu0
        %751 = vdwg.mxu0
        %v752 = vadd.f32 %v624, %v739
        %v753 = vadd.f32 %v627, %v742
        %v754 = vadd.f32 %v632, %v747
        %v755 = vld [vmem:[%s309] sm:$0x1]
        %v757 = vlaneseq
        %v758 = vshrl.u32 %v757, 7
        %v759 = vsub.s32 0, %v758
        %v760 = vrot.slane %v755, %v759
        %v762 = vadd.f32 %v752, %v760
        %v763 = vadd.f32 %v753, %v760
        %v764 = vadd.f32 %v754, %v760
        %v765 = vmul.f32 %v762, 0.5
        %v766 = vmul.f32 %v763, 0.5
        %v767 = vmul.f32 %v764, 0.5
        %v768 = vmul.f32 %v762, %v762
        %v769 = vmul.f32 %v763, %v763
        %v770 = vmul.f32 %v764, %v764
        %v771 = vmul.f32 %v768, %v762
        %v772 = vmul.f32 %v769, %v763
        %v773 = vmul.f32 %v770, %v764
        %v774 = vmul.f32 %v771, 0.044715
        %v775 = vmul.f32 %v772, 0.044715
        %v776 = vmul.f32 %v773, 0.044715
        %v777 = vadd.f32 %v762, %v774
        %v778 = vadd.f32 %v763, %v775
        %v779 = vadd.f32 %v764, %v776
        %v780 = vmul.f32 %v777, 0.7978846
        %v781 = vmul.f32 %v778, 0.7978846
        %v782 = vmul.f32 %v779, 0.7978846
        %v783 = vtanh.pop %v780
        %v784 = vtanh.pop %v781
        %v785 = vtanh.pop %v782
        %v786 = vadd.f32 %v783, 1.0
        %v787 = vadd.f32 %v784, 1.0
        %v788 = vadd.f32 %v785, 1.0
        %v789 = vmul.f32 %v765, %v786
        %v790 = vmul.f32 %v766, %v787
        %v791 = vmul.f32 %v767, %v788
        %v792 = vpack.c.bf16 %v790, %v789
        %v793 = vpack.c.bf16 %v791, %v791
        %v794 = vld [vmem:[%s268] sm:$0xf]
        %v795 = vld [vmem:[%s268 + $0x4] sm:$0xf]
        %v796 = vld [vmem:[%s268 + $0x8] sm:$0xf]
        %v797 = vld [vmem:[%s268 + $0xc] sm:$0xf]
        %v798 = vld [vmem:[%s268 + $0x10] sm:$0xf]
        %v799 = vld [vmem:[%s268 + $0x14] sm:$0xf]
        %v800 = vld [vmem:[%s268 + $0x18] sm:$0xf]
        %v801 = vld [vmem:[%s268 + $0x1c] sm:$0xf]
        %v802 = vld [vmem:[%s268 + $0x20] sm:$0xf]
        %v803 = vld [vmem:[%s268 + $0x24] sm:$0xf]
        %v804 = vld [vmem:[%s268 + $0x28] sm:$0xf]
        %v805 = vld [vmem:[%s268 + $0x2c] sm:$0xf]
        %v806 = vld [vmem:[%s268 + $0x30] sm:$0xf]
        %v807 = vld [vmem:[%s268 + $0x34] sm:$0xf]
        %v808 = vld [vmem:[%s268 + $0x38] sm:$0xf]
        %v809 = vld [vmem:[%s268 + $0x3c] sm:$0xf]
        %v810 = vld [vmem:[%s312] sm:$0x1]
        %v812 = vlaneseq
        %v813 = vshrl.u32 %v812, 7
        %v814 = vsub.s32 0, %v813
        %v815 = vrot.slane %v810, %v814
        %v833 = vunpack.c.l.b16 %v794
        %v834 = vunpack.c.l.b16 %v795
        %v835 = vunpack.c.l.b16 %v796
        %v836 = vunpack.c.l.b16 %v797
        %v837 = vunpack.c.l.b16 %v798
        %v838 = vunpack.c.l.b16 %v799
        %v839 = vunpack.c.l.b16 %v800
        %v840 = vunpack.c.l.b16 %v801
        %v841 = vunpack.c.l.b16 %v802
        %v842 = vunpack.c.l.b16 %v803
        %v843 = vunpack.c.l.b16 %v804
        %v844 = vunpack.c.l.b16 %v805
        %v845 = vunpack.c.l.b16 %v806
        %v846 = vunpack.c.l.b16 %v807
        %v847 = vunpack.c.l.b16 %v808
        %v848 = vunpack.c.l.b16 %v809
        %v849 = vpack.c.b16 %v834, %v833
        %v850 = vpack.c.b16 %v836, %v835
        %v851 = vpack.c.b16 %v838, %v837
        %v852 = vpack.c.b16 %v840, %v839
        %v853 = vpack.c.b16 %v842, %v841
        %v854 = vpack.c.b16 %v844, %v843
        %v855 = vpack.c.b16 %v846, %v845
        %v856 = vpack.c.b16 %v848, %v847
        %865 = vmatprep.subr.bf16.mxu0 0
        %866 = vmatpush1.bf16.msra.mxu0 %v856
        %867 = vmatprep.subr.bf16.mxu0 0
        %868 = vmatpush1.bf16.msra.mxu0 %v855
        %869 = vmatprep.subr.bf16.mxu0 0
        %870 = vmatpush1.bf16.msra.mxu0 %v854
        %871 = vmatprep.subr.bf16.mxu0 0
        %872 = vmatpush1.bf16.msra.mxu0 %v853
        %873 = vmatprep.subr.bf16.mxu0 0
        %874 = vmatpush1.bf16.msra.mxu0 %v852
        %875 = vmatprep.subr.bf16.mxu0 0
        %876 = vmatpush1.bf16.msra.mxu0 %v851
        %877 = vmatprep.subr.bf16.mxu0 0
        %878 = vmatpush1.bf16.msra.mxu0 %v850
        %879 = vmatprep.subr.bf16.mxu0 0
        %880 = vmatpush1.bf16.msra.mxu0 %v849
        %881 = vmatprep.subr.bf16.mxu0 0
        %882 = vmatpush2.bf16.msra.mxu0 0
        %883 = vmatprep.subr.bf16.mxu0 0
        %884 = vmatpush2.bf16.msra.mxu0 0
        %885 = vmatprep.subr.bf16.mxu0 0
        %886 = vmatpush2.bf16.msra.mxu0 0
        %887 = vmatprep.subr.bf16.mxu0 0
        %888 = vmatpush2.bf16.msra.mxu0 0
        %889 = vmatprep.subr.bf16.mxu0 0
        %890 = vmatpush2.bf16.msra.mxu0 0
        %891 = vmatprep.subr.bf16.mxu0 0
        %892 = vmatpush2.bf16.msra.mxu0 0
        %893 = vmatprep.subr.bf16.mxu0 0
        %894 = vmatpush2.bf16.msra.mxu0 0
        %895 = vmatprep.subr.bf16.mxu0 0
        %896 = vmatpush2.bf16.msra.mxu0 0
        %897 = vmatprep.mubr.bf16.mxu0 0
        %898 = vmatmul.mubr.bf16.gmra.mxu0 %v792
        %v899 = vpop.f32.mrf.mxu0
        %v900 = vadd.f32 %v815, %v899
        %v901 = vpop.f32.mrf.mxu0
        %v902 = vpop.f32.mrf.mxu0
        %v903 = vadd.f32 %v815, %v902
        %v904 = vpop.f32.mrf.mxu0
        %905 = vmatprep.mubr.bf16.mxu0 0
        %906 = vmatmul.mubr.bf16.gmra.mxu0 %v793
        %v907 = vpop.f32.mrf.mxu0
        %v908 = vadd.f32 %v815, %v907
        %v909 = vpop.f32.mrf.mxu0
        %v910 = vpop.f32.mrf.mxu0
        %v911 = vpop.f32.mrf.mxu0
        %912 = vdwg.mxu0
        %v913 = vadd.f32 %v395, %v900
        %v914 = vadd.f32 %v396, %v903
        %v915 = vadd.f32 %v397, %v908
        %v916 = vmul.f32 %v913, 0.5
        %v917 = vmul.f32 %v914, 0.5
        %v918 = vmul.f32 %v915, 0.5
        %v919 = vmul.f32 %v913, %v913
        %v920 = vmul.f32 %v914, %v914
        %v921 = vmul.f32 %v915, %v915
        %v922 = vmul.f32 %v919, %v913
        %v923 = vmul.f32 %v920, %v914
        %v924 = vmul.f32 %v921, %v915
        %v925 = vmul.f32 %v922, 0.044715
        %v926 = vmul.f32 %v923, 0.044715
        %v927 = vmul.f32 %v924, 0.044715
        %v928 = vadd.f32 %v913, %v925
        %v929 = vadd.f32 %v914, %v926
        %v930 = vadd.f32 %v915, %v927
        %v931 = vmul.f32 %v928, 0.7978846
        %v932 = vmul.f32 %v929, 0.7978846
        %v933 = vmul.f32 %v930, 0.7978846
        %v934 = vtanh.pop %v931
        %v935 = vtanh.pop %v932
        %v936 = vtanh.pop %v933
        %v937 = vadd.f32 %v934, 1.0
        %v938 = vadd.f32 %v935, 1.0
        %v939 = vadd.f32 %v936, 1.0
        %v940 = vmul.f32 %v916, %v937
        %v941 = vmul.f32 %v917, %v938
        %v942 = vmul.f32 %v918, %v939
        %p943 = scmp.lt.s32.totalorder %s36, 2
        // Predicated region
        $region86: #{dilated_layers_forward_nlc.1} parent=35 // pred_check
          %p944 = pneg %p943
        $region87: #{dilated_layers_forward_nlc.1} parent=35 // pred_check_branch
          %946 = sbr.rel (%p944) target = $region89
        $region88: #{dilated_layers_forward_nlc.1} parent=35 // pred_region
          %v947 = vlaneseq
          %v948 = vshrl.u32 %v947, 7
          %v949 = vadd.s32 %v948, 8
          %v950 = vadd.s32 %v948, 16
          %s951 = smul.u32 %s35, 8
          %s952 = ssub.s32 7, %s951
          %v953 = vstv %s952
          %vm954 = vcmp.ge.s32.totalorder %v948, %v953
          %vm955 = vcmp.ge.s32.totalorder %v949, %v953
          %vm956 = vcmp.ge.s32.totalorder %v950, %v953
          %s957 = ssub.s32 23, %s951
          %v958 = vstv %s957
          %vm959 = vcmp.lt.s32.totalorder %v948, %v958
          %vm960 = vcmp.lt.s32.totalorder %v949, %v958
          %vm961 = vcmp.lt.s32.totalorder %v950, %v958
          %vm962 = vmand %vm954, %vm959
          %vm963 = vmand %vm955, %vm960
          %vm964 = vmand %vm956, %vm961
          %v965 = vsel %vm962, 1, 0
          %v966 = vsel %vm963, 1, 0
          %v967 = vsel %vm964, 1, 0
          %vm968 = vcmp.eq.s32.totalorder %v965, 1
          %vm969 = vcmp.eq.s32.totalorder %v966, 1
          %vm970 = vcmp.eq.s32.totalorder %v967, 1
          %v971 = vsel %vm968, %v940, 0.0
          %v972 = vsel %vm969, %v941, 0.0
          %v973 = vsel %vm970, %v942, 0.0
          %974 = vst [vmem:[#allocation2 + $0x8] sm:$0xff] %v971
          %975 = vst [vmem:[#allocation2 + $0x10] sm:$0xff] %v972
          %976 = vst [vmem:[#allocation2 + $0x18] sm:$0x3f] %v973
        $region89: #{dilated_layers_forward_nlc.1} parent=35 // pred_fallthru
          _
        %p977 = scmp.eq.s32.totalorder %s36, 2
        // Predicated region
        $region90: #{dilated_layers_forward_nlc.1} parent=35 // pred_check
          %p978 = pneg %p977
        $region91: #{dilated_layers_forward_nlc.1} parent=35 // pred_check_branch
          %980 = sbr.rel (%p978) target = $region93
        $region92: #{dilated_layers_forward_nlc.1} parent=35 // pred_region
          %981 = vst [vmem:[%s320 - $0x7] sm:$0x80] %v940
          %982 = vst [vmem:[%s320 + $0x1] sm:$0x7f] %v941
        $region93: #{dilated_layers_forward_nlc.1} parent=35 // pred_fallthru
          _
        %p983 = scmp.lt.s32.totalorder %s34, 1
        %s984 = scalar_select %p983, %s34, 1
        %p985 = scmp.lt.s32.totalorder %s35, 1
        %s986 = scalar_select %p985, %s35, 1
        %s987 = smul.addr %s984, 2
        %s988 = sadd.s32 %s986, %s987
        %s989 = smul.addr %s988, 8
        %s990 = scalar_lea.vmem %s6, %s989
        // Predicated region
        $region94: #{dilated_layers_forward_nlc.1} parent=35 // pred_check
          %p991 = pneg %p172
        $region95: #{dilated_layers_forward_nlc.1} parent=35 // pred_check_branch
          %993 = sbr.rel (%p991) target = $region97
        $region96: #{dilated_layers_forward_nlc.1} parent=35 // pred_region
          _
        $region97: #{dilated_layers_forward_nlc.1} parent=35 // pred_fallthru
          _
      $region36: #{dilated_layers_forward_nlc.1} parent=5 // pred_fallthru
        _
      %p994 = scmp.le.s32.totalorder 2, %s24
      // Predicated region
      $region98: #{dilated_layers_forward_nlc.1} parent=5 // pred_check
        %p995 = pneg %p994
      $region99: #{dilated_layers_forward_nlc.1} parent=5 // pred_check_branch
        %997 = sbr.rel (%p995) target = $region101
      $region100: #{dilated_layers_forward_nlc.1} parent=5 // pred_region
        %s998 = ssub.s32 %s24, 2
        // Predicated region
        $region102: #{dilated_layers_forward_nlc.1} parent=100 // pred_check
          %p999 = pneg %p178
        $region103: #{dilated_layers_forward_nlc.1} parent=100 // pred_check_branch
          %1001 = sbr.rel (%p999) target = $region105
        $region104: #{dilated_layers_forward_nlc.1} parent=100 // pred_region
          %p1002 = scmp.lt.s32.totalorder %s37, 1
          %s1003 = scalar_select %p1002, %s37, 1
          %p1004 = scmp.lt.s32.totalorder %s38, 1
          %s1005 = scalar_select %p1004, %s38, 1
          %s1006 = smul.addr %s1003, 2
          %s1007 = sadd.s32 %s1005, %s1006
          %s1008 = smul.addr %s1007, 8
          %s1009 = scalar_lea.vmem %s6, %s1008
        $region105: #{dilated_layers_forward_nlc.1} parent=100 // pred_fallthru
          _
      $region101: #{dilated_layers_forward_nlc.1} parent=5 // pred_fallthru
        _
    $region6: #{dilated_layers_forward_nlc.1} parent=1 // loop_footer
      %s28 = sadd.s32 1, %s24
    $region7: #{dilated_layers_forward_nlc.1} parent=1 // loop_footer_branch
      %23 = sbr.rel target = $region3
    $region8: #{dilated_layers_forward_nlc.1} parent=1 // loop_exit
      _
    %1010 = vsyncpa [#allocation7], 1
    %s1011 = scalar_lea.sflag [#allocation7], 1
    %1012 = vsyncpa %s1011, 1
    %1013 = vsyncpa [#allocation9], 1
    %s1014 = scalar_lea.sflag [#allocation9], 1
    %1015 = vsyncpa %s1014, 1
  %1016 = vsyncmov [#allocation3]
  %s1017 = vpop.sfrf %1016
  %p1018 = scmp.eq.s32.totalorder %s1017, 0
  %p1019 = pneg %p1018
  %1021 = shalt.err (%p1019)

</llo_original>
